<compile_context>
chip_gen: v6e
topology: v6e:2x2x1
jax: 0.10.0
libtpu: 0.0.40
codegen_flags: <defaults>
</compile_context>

<pallas_src>
import functools

import jax
import jax.numpy as jnp
from jax.experimental import pallas as pl
from jax.experimental.pallas import tpu as pltpu


def _round_up(n, m):
    return (n + m - 1) // m * m


# --------------------------------------------------------------------------
# Kernels
# --------------------------------------------------------------------------

def _mm_bias_kernel_singlek(x_ref, w_ref, b_ref, o_ref, *, tn):
    """o = x @ w + b in one shot (full K resident)."""
    j = pl.program_id(1)
    acc = jnp.dot(x_ref[...], w_ref[...], preferred_element_type=jnp.float32)
    b = b_ref[:, pl.ds(pl.multiple_of(j * tn, 128), tn)]
    o_ref[...] = (acc + b).astype(o_ref.dtype)


def _mm_bias_kernel_multik(x_ref, w_ref, b_ref, o_ref, acc_ref, *, tn):
    """o = x @ w + b, f32 accumulation over the K grid axis.

    Bias is folded into the accumulator init (k == 0), finalize is a pure
    cast + store.
    """
    j = pl.program_id(1)

    @pl.when(pl.program_id(2) == 0)
    def _init():
        b = b_ref[:, pl.ds(pl.multiple_of(j * tn, 128), tn)]
        acc_ref[...] = jnp.broadcast_to(b, acc_ref.shape)

    acc_ref[...] += jnp.dot(x_ref[...], w_ref[...],
                            preferred_element_type=jnp.float32)

    @pl.when(pl.program_id(2) == pl.num_programs(2) - 1)
    def _finalize():
        o_ref[...] = acc_ref[...].astype(o_ref.dtype)


# --------------------------------------------------------------------------
# Tiling plan (weight dims are fixed per layer -> plan once at init)
# --------------------------------------------------------------------------

_TM_MAX = 512
_VMEM_BUDGET = 40 * 1024 * 1024   # leave headroom under the 48 MiB limit / v7x


def _plan_weight_tiling(d_in, d_out):
    """Returns (K_pad, N_pad, tk, tn) with tk | K_pad and tn | N_pad."""
    K_pad = _round_up(d_in, 128)
    N_pad = _round_up(d_out, 128)

    # tn: whole N if small, else the largest divisor of N_pad in {512,384,256,128}.
    if N_pad <= 512:
        tn = N_pad
    else:
        tn = 128
        for t in (512, 384, 256):
            if N_pad % t == 0:
                tn = t
                break

    def working_set(tk_):
        # double-buffered bf16 input tiles + f32 acc scratch + dbl-buf f32 out
        return (2 * (_TM_MAX * tk_ + tk_ * tn) * 2
                + _TM_MAX * tn * 4
                + 2 * _TM_MAX * tn * 4
                + 2 * N_pad * 4)

    # Collapse K when the full-K working set fits; else largest divisor <= 1024.
    if working_set(K_pad) <= _VMEM_BUDGET:
        tk = K_pad
    else:
        tk = 128
        for t in (1024, 896, 768, 640, 512, 384, 256):
            if K_pad % t == 0 and working_set(t) <= _VMEM_BUDGET:
                tk = t
                break
    return K_pad, N_pad, tk, tn


# --------------------------------------------------------------------------
# Wrapper
# --------------------------------------------------------------------------

@functools.partial(jax.jit, static_argnames=("n_out", "tn", "tk"))
def _linear_bias_pallas(x2d, w_p, b_p, *, n_out, tn, tk):
    """y = x2d @ W + b with pre-padded bf16 W [K_pad, N_pad] and f32 b [1, N_pad]."""
    out_dtype = x2d.dtype
    M, K = x2d.shape
    K_pad, N_pad = w_p.shape
    assert K <= K_pad and K_pad % tk == 0 and N_pad % tn == 0

    # ---- tm: align M to 8, pick a tile that minimizes padding waste ----
    M_al = _round_up(M, 8)
    if M_al <= _TM_MAX:
        tm, M_pad = M_al, M_al
    else:
        tm, M_pad, waste = 128, _round_up(M_al, 128), None
        for t in (512, 256, 128):
            p = _round_up(M_al, t)
            if waste is None or (p - M_al) < waste:
                tm, M_pad, waste = t, p, p - M_al
    # Keep both v7x TensorCores busy: ensure >= 2 blocks on a parallel axis.
    if (M_pad // tm) * (N_pad // tn) < 2 and tm % 16 == 0:
        tm //= 2

    # ---- activation cast/pad only when actually needed ----
    x_b = x2d if x2d.dtype == jnp.bfloat16 else x2d.astype(jnp.bfloat16)
    if M_pad != M or K_pad != K:
        x_b = jnp.pad(x_b, ((0, M_pad - M), (0, K_pad - K)))

    grid_m, grid_n, grid_k = M_pad // tm, N_pad // tn, K_pad // tk
    out_itemsize = jnp.dtype(out_dtype).itemsize
    cost = pl.CostEstimate(
        flops=2 * M_pad * N_pad * K_pad,
        transcendentals=0,
        bytes_accessed=(x_b.size * 2 * grid_n          # X streamed per N block
                        + w_p.size * 2 * grid_m        # W streamed per M block
                        + b_p.size * 4                 # bias DMA'd once
                        + M_pad * N_pad * out_itemsize),
    )

    if grid_k == 1:
        kernel = functools.partial(_mm_bias_kernel_singlek, tn=tn)
        grid = (grid_m, grid_n)
        in_specs = [
            pl.BlockSpec((tm, K_pad), lambda i, j: (i, 0)),      # x tile (full K)
            pl.BlockSpec((K_pad, tn), lambda i, j: (0, j)),      # W tile (full K)
            pl.BlockSpec((1, N_pad), lambda i, j: (0, 0)),       # bias (grid-invariant)
        ]
        out_specs = pl.BlockSpec((tm, tn), lambda i, j: (i, j))
        scratch = []
        dims = ("parallel", "parallel")
    else:
        kernel = functools.partial(_mm_bias_kernel_multik, tn=tn)
        grid = (grid_m, grid_n, grid_k)
        in_specs = [
            pl.BlockSpec((tm, tk), lambda i, j, k: (i, k)),      # x tile
            pl.BlockSpec((tk, tn), lambda i, j, k: (k, j)),      # W tile (M-indep)
            pl.BlockSpec((1, N_pad), lambda i, j, k: (0, 0)),    # bias (grid-invariant)
        ]
        out_specs = pl.BlockSpec((tm, tn), lambda i, j, k: (i, j))
        scratch = [pltpu.VMEM((tm, tn), jnp.float32)]
        dims = ("parallel", "parallel", "arbitrary")

    out = pl.pallas_call(
        kernel,
        out_shape=jax.ShapeDtypeStruct((M_pad, N_pad), out_dtype),
        grid_spec=pltpu.PrefetchScalarGridSpec(
            num_scalar_prefetch=0,
            grid=grid,
            in_specs=in_specs,
            out_specs=out_specs,
            scratch_shapes=scratch,
        ),
        compiler_params=pltpu.CompilerParams(
            dimension_semantics=dims,
            vmem_limit_bytes=48 * 1024 * 1024,
        ),
        cost_estimate=cost,
    )(x_b, w_p, b_p)

    return out[:M, :n_out]


# --------------------------------------------------------------------------
# Module
# --------------------------------------------------------------------------

class LoRALayerMultimodal:
    """JAX/Pallas port of _LoRALayer_multimodal (eval mode: dropout == identity).

    Dropout is identity and weights are frozen per call, so the LoRA branch is
    folded into the base weight once at construction:
        W_merged[m] = W + wa[m] @ wb[m]
    Both the normal path (W_merged[m]) and the 'skip' path (W) run the same
    tiled MXU matmul+bias Pallas kernel on pre-padded bf16 weights.
    """

    def __init__(self, key, d_in, d_out, r, modulars=("rgb", "depth")):
        k_w, k_b, *k_mod = jax.random.split(key, 2 + 2 * len(modulars))
        # Base (frozen) linear — stored pre-transposed: [D_in, D_out].
        self.w = jax.random.normal(k_w, (d_in, d_out), jnp.float32) * 0.02
        self.b = jax.random.normal(k_b, (1, d_out), jnp.float32) * 0.02

        self._n_out = d_out
        K_pad, N_pad, tk, tn = _plan_weight_tiling(d_in, d_out)
        self._tk, self._tn = tk, tn

        def pad_cast(w_f32):
            return jnp.pad(w_f32.astype(jnp.bfloat16),
                           ((0, K_pad - d_in), (0, N_pad - d_out)))

        self.lora = {}
        self.w_merged_bf16 = {}
        for i, m in enumerate(modulars):
            ka, kb = k_mod[2 * i], k_mod[2 * i + 1]
            wa = jax.random.normal(ka, (d_in, r), jnp.float32) * 0.02   # w_a: D_in -> r
            wb = jax.random.normal(kb, (r, d_out), jnp.float32) * 0.02  # w_b: r -> D_out
            self.lora[m] = (wa, wb)
            # Eval-mode fold (f32 merge, bf16 storage for the MXU), padded once.
            self.w_merged_bf16[m] = pad_cast(self.w + wa @ wb)
        self.w_bf16 = pad_cast(self.w)
        self.b_pad = jnp.pad(self.b.astype(jnp.float32),
                             ((0, 0), (0, N_pad - d_out)))
        # TODO(synk): training-mode dropout / trainable (unfolded) LoRA path not
        # implemented (eval-mode fold only); bf16-cast of the merged weight can
        # wash out a very small LoRA delta — keep a separate f32 correction if
        # accuracy regresses at production scales; int8 (v5e/v6e) / fp8 (v7x)
        # frozen-weight quantization left as a follow-up.

    def __call__(self, x, modular="rgb"):
        skip = "skip" in modular
        modular_ = modular.split("-")[0] if skip else modular
        w = self.w_bf16 if skip else self.w_merged_bf16[modular_]
        B, N, D = x.shape
        x2d = x.reshape(B * N, D)
        y2d = _linear_bias_pallas(x2d, w, self.b_pad,
                                  n_out=self._n_out, tn=self._tn, tk=self._tk)
        return y2d.reshape(B, N, -1)


if __name__ == "__main__":
    key = jax.random.PRNGKey(0)
    k_layer, k_x = jax.random.split(key)

    B, N, D_in, D_out, r = 2, 8, 32, 32, 4
    layer = LoRALayerMultimodal(k_layer, D_in, D_out, r, modulars=("rgb", "depth"))
    x = jax.random.normal(k_x, (B, N, D_in), jnp.float32)

    # Normal path (LoRA applied), skip path (base linear only), second modular.
    y = jax.block_until_ready(layer(x, modular="rgb"))
    y_skip = jax.block_until_ready(layer(x, modular="rgb-skip"))
    y_depth = jax.block_until_ready(layer(x, modular="depth"))

    # Plain-JAX f32 reference of the original (unfolded) module semantics.
    x2d = x.reshape(B * N, D_in)
    wa, wb = layer.lora["rgb"]
    ref = (x2d @ layer.w + layer.b) + (x2d @ wa) @ wb
    ref_skip = x2d @ layer.w + layer.b
    wa_d, wb_d = layer.lora["depth"]
    ref_depth = (x2d @ layer.w + layer.b) + (x2d @ wa_d) @ wb_d

    # bf16 MXU inputs with f32 accumulation -> loose-ish tolerance vs f32 ref.
    assert jnp.allclose(y.reshape(B * N, D_out), ref, atol=1e-2, rtol=1e-2)
    assert jnp.allclose(y_skip.reshape(B * N, D_out), ref_skip, atol=1e-2, rtol=1e-2)
    assert jnp.allclose(y_depth.reshape(B * N, D_out), ref_depth, atol=1e-2, rtol=1e-2)

    print("KERNEL_OK")
</pallas_src>

<mosaic_0001>
module attributes {stable_mosaic.version = 11 : i64} {
  func.func @_mm_bias_kernel_singlek(%arg0: i32, %arg1: i32, %arg2: memref<8x128xbf16, #tpu.memory_space<vmem>>, %arg3: memref<128x128xbf16, #tpu.memory_space<vmem>>, %arg4: memref<1x128xf32, #tpu.memory_space<vmem>>, %arg5: memref<8x128xf32, #tpu.memory_space<vmem>>) attributes {dimension_semantics = [#tpu.dimension_semantics<parallel>, #tpu.dimension_semantics<parallel>], iteration_bounds = array<i64: 2, 1>, scalar_prefetch = 0 : i64, scratch_operands = 0 : i64, tpu.core_type = #tpu.core_type<tc>, window_params = [{transform_indices = @transform_0, window_bounds = array<i64: 8, 128>}, {transform_indices = @transform_1, window_bounds = array<i64: 128, 128>}, {pipeline_mode = #tpu.pipeline_mode<synchronous>, transform_indices = @transform_2, window_bounds = array<i64: 1, 128>}, {transform_indices = @transform_3, window_bounds = array<i64: 8, 128>}]} {
    %c0 = arith.constant 0 : index
    %c0_0 = arith.constant 0 : index
    %0 = vector.load %arg2[%c0, %c0_0] : memref<8x128xbf16, #tpu.memory_space<vmem>>, vector<8x128xbf16>
    %c0_1 = arith.constant 0 : index
    %c0_2 = arith.constant 0 : index
    %1 = vector.load %arg3[%c0_1, %c0_2] : memref<128x128xbf16, #tpu.memory_space<vmem>>, vector<128x128xbf16>
    %cst = arith.constant dense<0.000000e+00> : vector<8x128xf32>
    %2 = tpu.matmul %0, %1, %cst {dimension_numbers = #tpu.dot_dimension_numbers<[1], [0], [0], [1], [0, 0, 1, 1], [], []>} : vector<8x128xbf16>, vector<128x128xbf16>, vector<8x128xf32> -> vector<8x128xf32>
    %c128_i32 = arith.constant 128 : i32
    %3 = arith.muli %arg1, %c128_i32 : i32
    %4 = tpu.assume_multiple %3, 128 : i32
    %c0_3 = arith.constant 0 : index
    %5 = arith.index_cast %4 : i32 to index
    %6 = vector.load %arg4[%c0_3, %5] : memref<1x128xf32, #tpu.memory_space<vmem>>, vector<1x128xf32>
    %7 = vector.broadcast %6 : vector<1x128xf32> to vector<8x128xf32>
    %8 = arith.addf %2, %7 : vector<8x128xf32>
    %c0_4 = arith.constant 0 : index
    %c0_5 = arith.constant 0 : index
    %9 = vector.load %arg5[%c0_4, %c0_5] : memref<8x128xf32, #tpu.memory_space<vmem>>, vector<8x128xf32>
    tpu.vector_store %arg5[%c0_4, %c0_5], %8 {strides = array<i32>} : memref<8x128xf32, #tpu.memory_space<vmem>>, vector<8x128xf32>,
    return
  }
  func.func @transform_0(%arg0: i32, %arg1: i32) -> (i32, i32) {
    %c0_i32 = arith.constant 0 : i32
    %c0_i32_0 = arith.constant 0 : i32
    return %arg0, %c0_i32 : i32, i32
  }
  func.func @transform_1(%arg0: i32, %arg1: i32) -> (i32, i32) {
    %c0_i32 = arith.constant 0 : i32
    %c0_i32_0 = arith.constant 0 : i32
    return %c0_i32, %arg1 : i32, i32
  }
  func.func @transform_2(%arg0: i32, %arg1: i32) -> (i32, i32) {
    %c0_i32 = arith.constant 0 : i32
    %c0_i32_0 = arith.constant 0 : i32
    %c0_i32_1 = arith.constant 0 : i32
    return %c0_i32, %c0_i32_0 : i32, i32
  }
  func.func @transform_3(%arg0: i32, %arg1: i32) -> (i32, i32) {
    %c0_i32 = arith.constant 0 : i32
    return %arg0, %arg1 : i32, i32
  }
}

</mosaic_0001>

<llo_original>
// kernel: _linear_bias_pallas.1
$region0: #{_linear_bias_pallas.1}
  #allocation0 [shape = 'u32[]', space=smem, size = 0x4, offset = 0x4, fixed_abs, tag = 'smem constant byte address 0x4 - core index']
  #allocation1 [shape = 'u32[144,128]{1,0:T(1,128)}', space=vmem, size = 0x12000, scoped, tag = 'internal scratch']
  %s0 = inlined_call_operand.vmem [shape: bf16[16,128], index: 0, kind: input, shape index: {}]
  %s1 = inlined_call_operand.hbm [shape: bf16[128,128], index: 1, kind: input, shape index: {}]
  %s2 = inlined_call_operand.vmem [shape: f32[1,128], index: 2, kind: input, shape index: {}]
  %s3 = inlined_call_operand.hbm [shape: f32[16,128], index: 3, kind: output, shape index: {}]
  %s4 = sld [smem:[#allocation0]]
  $region49: #{_linear_bias_pallas.1} parent=0
    _
  %s6 = ssub.s32 1, %s4
  %s7 = scalar_select 0, %s6, %s4
  $region1: #{_linear_bias_pallas.1} parent=0
    #allocation2 [shape = 'u8[32768]{0}', space=vmem, size = 0x8000, scoped, tag = 'input window, operand 1, single buffered']
    #allocation3 [shape = 's32[2]{0}', space=sflag, size = 0x8, scoped, tag = 'scoped memory for _linear_bias_pallas.1']
    #allocation4 [shape = 's32[2]{0}', space=sflag, size = 0x8, scoped, tag = 'scoped memory for _linear_bias_pallas.1']
    #allocation5 [shape = 'u8[8192]{0}', space=vmem, size = 0x2000, scoped, tag = 'output window, operand 0']
    %8 = vsyncpa [#allocation3], 0
    %9 = vsyncpa [#allocation4], 0
    %s10 = scalar_lea.sflag [#allocation4], 1
    %11 = vsyncpa %s10, 0
    loop: start=0, step=1, limit=4
    $region2: #{_linear_bias_pallas.1} parent=1 // loop_pre_header
      _
    $region3: #{_linear_bias_pallas.1} parent=1 // loop_header
      %s13 = sphi 0, %s17
      %p14 = scmp.ge.s32.totalorder %s13, 4
      %s20 = sphi 0, %s32
      %s21 = sphi 0, %s28
      %s22 = sphi 0, %s20
      %s23 = sphi 0, %s21
      %s24 = sphi 0, %s22
      %s25 = sphi 0, %s23
      %s35 = sphi 0, %s37
      %s38 = sphi 0, %s35
      %s39 = sphi 0, %s38
      %s55 = sphi 0, %s39
      %s61 = sphi 0, %s63
      %s64 = sphi 0, %s61
      %s65 = sphi 0, %s64
      %s81 = sphi 0, %s65
      %s85 = sphi 0, %s85
      %s87 = sphi 0, %s85
      %s88 = sphi 0, %s87
      %s102 = sphi 0, %s88
      %s110 = sphi 0, %s112
      %s113 = sphi 0, %s110
      %s114 = sphi 0, %s113
      %s130 = sphi 0, %s114
    $region4: #{_linear_bias_pallas.1} parent=1 // loop_header_branch
      %16 = sbr.rel (%p14) target = $region8
    $region5: #{_linear_bias_pallas.1} parent=1 // loop_body
      %s18 = ssub.s32 %s13, 1
      %s19 = ssub.s32 %s13, 2
      %s26 = sadd.s32 1, %s21
      %p27 = scmp.ge.s32.totalorder %s26, 1
      %s28 = scalar_select %p27, 0, %s26
      %s29 = sadd.s32 1, %s20
      %s30 = scalar_select %p27, %s29, %s20
      %p31 = scmp.ge.s32.totalorder %s30, 2
      %s32 = scalar_select %p31, 0, %s30
      %s33 = ssub.s32 %s20, %s32
      %p34 = scmp.eq.s32.totalorder %s33, 0
      %s36 = sadd.s32 %s35, 1
      %s37 = scalar_select %p34, %s35, %s36
      %p40 = pneg %p34
      %p41 = scmp.eq.s32.totalorder %s13, 1
      %p42 = por %p40, %p41
      %p43 = scmp.ne.s32.totalorder %s35, %s38
      %p44 = scmp.eq.s32.totalorder %s13, 0
      %p45 = por %p43, %p44
      %p46 = scmp.ne.s32.totalorder %s35, %s38
      %p47 = scmp.eq.s32.totalorder %s18, 1
      %p48 = por %p46, %p47
      %p49 = scmp.ne.s32.totalorder %s38, %s39
      %p50 = scmp.eq.s32.totalorder %s18, 0
      %p51 = por %p49, %p50
      %p52 = scmp.ne.s32.totalorder %s38, %s39
      %p53 = scmp.eq.s32.totalorder %s19, 1
      %p54 = por %p52, %p53
      %p56 = scmp.ne.s32.totalorder %s39, %s55
      %p57 = scmp.eq.s32.totalorder %s19, 0
      %p58 = por %p56, %p57
      %s59 = ssub.s32 %s21, %s28
      %p60 = scmp.eq.s32.totalorder %s59, 0
      %s62 = sadd.s32 %s61, 1
      %s63 = scalar_select %p60, %s61, %s62
      %p66 = pneg %p60
      %p67 = scmp.eq.s32.totalorder %s13, 1
      %p68 = por %p66, %p67
      %p69 = scmp.ne.s32.totalorder %s61, %s64
      %p70 = scmp.eq.s32.totalorder %s13, 0
      %p71 = por %p69, %p70
      %p72 = scmp.ne.s32.totalorder %s61, %s64
      %p73 = scmp.eq.s32.totalorder %s18, 1
      %p74 = por %p72, %p73
      %p75 = scmp.ne.s32.totalorder %s64, %s65
      %p76 = scmp.eq.s32.totalorder %s18, 0
      %p77 = por %p75, %p76
      %p78 = scmp.ne.s32.totalorder %s64, %s65
      %p79 = scmp.eq.s32.totalorder %s19, 1
      %p80 = por %p78, %p79
      %p82 = scmp.ne.s32.totalorder %s65, %s81
      %p83 = scmp.eq.s32.totalorder %s19, 0
      %p84 = por %p82, %p83
      %s86 = sadd.s32 %s85, 1
      %p89 = scmp.eq.s32.totalorder %s13, 1
      %p90 = scmp.ne.s32.totalorder %s85, %s87
      %p91 = scmp.eq.s32.totalorder %s13, 0
      %p92 = por %p90, %p91
      %p93 = scmp.ne.s32.totalorder %s85, %s87
      %p94 = scmp.eq.s32.totalorder %s18, 1
      %p95 = por %p93, %p94
      %p96 = scmp.ne.s32.totalorder %s87, %s88
      %p97 = scmp.eq.s32.totalorder %s18, 0
      %p98 = por %p96, %p97
      %p99 = scmp.ne.s32.totalorder %s87, %s88
      %p100 = scmp.eq.s32.totalorder %s19, 1
      %p101 = por %p99, %p100
      %p103 = scmp.ne.s32.totalorder %s88, %s102
      %p104 = scmp.eq.s32.totalorder %s19, 0
      %p105 = por %p103, %p104
      %s106 = ssub.s32 %s20, %s32
      %s107 = ssub.s32 %s21, %s28
      %s108 = sor.u32 %s106, %s107
      %p109 = scmp.eq.s32.totalorder %s108, 0
      %s111 = sadd.s32 %s110, 1
      %s112 = scalar_select %p109, %s110, %s111
      %p115 = pneg %p109
      %p116 = scmp.eq.s32.totalorder %s13, 1
      %p117 = por %p115, %p116
      %p118 = scmp.ne.s32.totalorder %s110, %s113
      %p119 = scmp.eq.s32.totalorder %s13, 0
      %p120 = por %p118, %p119
      %p121 = scmp.ne.s32.totalorder %s110, %s113
      %p122 = scmp.eq.s32.totalorder %s18, 1
      %p123 = por %p121, %p122
      %p124 = scmp.ne.s32.totalorder %s113, %s114
      %p125 = scmp.eq.s32.totalorder %s18, 0
      %p126 = por %p124, %p125
      %p127 = scmp.ne.s32.totalorder %s113, %s114
      %p128 = scmp.eq.s32.totalorder %s19, 1
      %p129 = por %p127, %p128
      %p131 = scmp.ne.s32.totalorder %s114, %s130
      %p132 = scmp.eq.s32.totalorder %s19, 0
      %p133 = por %p131, %p132
      %p134 = scmp.le.s32.totalorder 1, %s13
      %p135 = scmp.lt.s32.totalorder %s13, 3
      %p136 = pnand %p134, %p135
      %p137 = pneg %p136
      // Predicated region
      $region9: #{_linear_bias_pallas.1} parent=5 // pred_check
        _
      $region10: #{_linear_bias_pallas.1} parent=5 // pred_check_branch
        %139 = sbr.rel (%p136) target = $region12
      $region11: #{_linear_bias_pallas.1} parent=5 // pred_region
        %s140 = ssub.s32 %s13, 1
        // Predicated region
        $region13: #{_linear_bias_pallas.1} parent=11 // pred_check
          %p141 = pneg %p77
        $region14: #{_linear_bias_pallas.1} parent=11 // pred_check_branch
          %143 = sbr.rel (%p141) target = $region16
        $region15: #{_linear_bias_pallas.1} parent=11 // pred_region
          %s145 = ssub.s32 1024, 1024
          %146 = vsyncadd [#allocation3], %s145
          %s147 = smul.addr %s23, 64
          %s148 = scalar_lea.hbm %s1, %s147
          %s149 = sshll.u32 [#allocation2], 4
          %s150 = int_to_ptr.vmem [resolvable:$true] %s149
          %155 = dma.hbm_to_vmem [thread:$0]  %s148, 1024, %s150, [#allocation3], 64, 64, 4
        $region16: #{_linear_bias_pallas.1} parent=11 // pred_fallthru
          _
        // Predicated region
        $region17: #{_linear_bias_pallas.1} parent=11 // pred_check
          %p156 = pneg %p98
        $region18: #{_linear_bias_pallas.1} parent=11 // pred_check_branch
          %158 = sbr.rel (%p156) target = $region20
        $region19: #{_linear_bias_pallas.1} parent=11 // pred_region
          _
        $region20: #{_linear_bias_pallas.1} parent=11 // pred_fallthru
          _
      $region12: #{_linear_bias_pallas.1} parent=5 // pred_fallthru
        _
      %p159 = scmp.lt.s32.totalorder %s13, 2
      // Predicated region
      $region21: #{_linear_bias_pallas.1} parent=5 // pred_check
        %p160 = pneg %p159
      $region22: #{_linear_bias_pallas.1} parent=5 // pred_check_branch
        %162 = sbr.rel (%p160) target = $region24
      $region23: #{_linear_bias_pallas.1} parent=5 // pred_region
        // Predicated region
        $region25: #{_linear_bias_pallas.1} parent=23 // pred_check
          %p163 = pneg %p45
        $region26: #{_linear_bias_pallas.1} parent=23 // pred_check_branch
          %165 = sbr.rel (%p163) target = $region28
        $region27: #{_linear_bias_pallas.1} parent=23 // pred_region
          %p166 = scmp.lt.s32.totalorder %s20, 1
          %s167 = scalar_select %p166, %s20, 1
          %s168 = smul.addr %s167, 4
          %s169 = scalar_lea.vmem %s0, %s168
        $region28: #{_linear_bias_pallas.1} parent=23 // pred_fallthru
          _
      $region24: #{_linear_bias_pallas.1} parent=5 // pred_fallthru
        _
      %p170 = scmp.le.s32.totalorder 1, %s13
      %p171 = scmp.lt.s32.totalorder %s13, 3
      %p172 = pnand %p170, %p171
      %p173 = pneg %p172
      // Predicated region
      $region29: #{_linear_bias_pallas.1} parent=5 // pred_check
        _
      $region30: #{_linear_bias_pallas.1} parent=5 // pred_check_branch
        %175 = sbr.rel (%p172) target = $region32
      $region31: #{_linear_bias_pallas.1} parent=5 // pred_region
        %s176 = ssub.s32 %s13, 1
        // Predicated region
        $region33: #{_linear_bias_pallas.1} parent=31 // pred_check
          %p177 = pneg %p77
        $region34: #{_linear_bias_pallas.1} parent=31 // pred_check_branch
          %179 = sbr.rel (%p177) target = $region36
        $region35: #{_linear_bias_pallas.1} parent=31 // pred_region
          %180 = dma.done [#allocation3], 1024
        $region36: #{_linear_bias_pallas.1} parent=31 // pred_fallthru
          _
        %p181 = scmp.lt.s32.totalorder %s22, 1
        %s182 = scalar_select %p181, %s22, 1
        %s183 = smul.addr %s182, 4
        %s184 = scalar_lea.vmem %s0, %s183
        %p185 = pneg %p51
        %p186 = pneg %p48
        %p187 = pneg %p77
        %p188 = pneg %p74
        %p189 = pneg %p98
        %p190 = pneg %p95
        %p191 = pneg %p126
        %p192 = pneg %p123
        %s193 = sand.u32 %s113, 1
        %s194 = scalar_lea.sflag [#allocation4], %s193
        %s195 = sand.u32 %s113, 1
        %s196 = smul.addr %s195, 8
        %s197 = scalar_lea.vmem [#allocation5], %s196
        %p198 = scmp.lt.s32.totalorder %s22, 1
        %s199 = scalar_select %p198, %s22, 1
        %s200 = smul.addr %s199, 4
        %s201 = scalar_lea.vmem %s0, %s200
        %v203 = vld [vmem:[%s201] sm:$0xf]
        %v204 = vld [vmem:[#allocation2] sm:$0xf]
        %v205 = vld [vmem:[#allocation2 + $0x4] sm:$0xf]
        %v206 = vld [vmem:[#allocation2 + $0x8] sm:$0xf]
        %v207 = vld [vmem:[#allocation2 + $0xc] sm:$0xf]
        %v208 = vld [vmem:[#allocation2 + $0x10] sm:$0xf]
        %v209 = vld [vmem:[#allocation2 + $0x14] sm:$0xf]
        %v210 = vld [vmem:[#allocation2 + $0x18] sm:$0xf]
        %v211 = vld [vmem:[#allocation2 + $0x1c] sm:$0xf]
        %v212 = vld [vmem:[#allocation2 + $0x20] sm:$0xf]
        %v213 = vld [vmem:[#allocation2 + $0x24] sm:$0xf]
        %v214 = vld [vmem:[#allocation2 + $0x28] sm:$0xf]
        %v215 = vld [vmem:[#allocation2 + $0x2c] sm:$0xf]
        %v216 = vld [vmem:[#allocation2 + $0x30] sm:$0xf]
        %v217 = vld [vmem:[#allocation2 + $0x34] sm:$0xf]
        %v218 = vld [vmem:[#allocation2 + $0x38] sm:$0xf]
        %v219 = vld [vmem:[#allocation2 + $0x3c] sm:$0xf]
        %s220 = smul.u32 %s23, 128
        %s221 = sshra.s32 %s220, 7
        %s222 = sand.u32 %s220, 127
        %s223 = scalar_lea.vmem %s2, %s221
        %v224 = vld [vmem:[%s223] sm:$0x1]
        %v226 = vlaneseq
        %v227 = vshrl.u32 %v226, 7
        %v228 = vsub.s32 0, %v227
        %v229 = vrot.slane %v224, %v228
        %v247 = vunpack.c.l.b16 %v204
        %v248 = vunpack.c.l.b16 %v205
        %v249 = vunpack.c.l.b16 %v206
        %v250 = vunpack.c.l.b16 %v207
        %v251 = vunpack.c.l.b16 %v208
        %v252 = vunpack.c.l.b16 %v209
        %v253 = vunpack.c.l.b16 %v210
        %v254 = vunpack.c.l.b16 %v211
        %v255 = vunpack.c.l.b16 %v212
        %v256 = vunpack.c.l.b16 %v213
        %v257 = vunpack.c.l.b16 %v214
        %v258 = vunpack.c.l.b16 %v215
        %v259 = vunpack.c.l.b16 %v216
        %v260 = vunpack.c.l.b16 %v217
        %v261 = vunpack.c.l.b16 %v218
        %v262 = vunpack.c.l.b16 %v219
        %v263 = vpack.c.b16 %v248, %v247
        %v264 = vpack.c.b16 %v250, %v249
        %v265 = vpack.c.b16 %v252, %v251
        %v266 = vpack.c.b16 %v254, %v253
        %v267 = vpack.c.b16 %v256, %v255
        %v268 = vpack.c.b16 %v258, %v257
        %v269 = vpack.c.b16 %v260, %v259
        %v270 = vpack.c.b16 %v262, %v261
        %279 = vmatprep.subr.bf16.mxu0 0
        %280 = vmatpush1.bf16.msra.mxu0 %v270
        %281 = vmatprep.subr.bf16.mxu0 0
        %282 = vmatpush1.bf16.msra.mxu0 %v269
        %283 = vmatprep.subr.bf16.mxu0 0
        %284 = vmatpush1.bf16.msra.mxu0 %v268
        %285 = vmatprep.subr.bf16.mxu0 0
        %286 = vmatpush1.bf16.msra.mxu0 %v267
        %287 = vmatprep.subr.bf16.mxu0 0
        %288 = vmatpush1.bf16.msra.mxu0 %v266
        %289 = vmatprep.subr.bf16.mxu0 0
        %290 = vmatpush1.bf16.msra.mxu0 %v265
        %291 = vmatprep.subr.bf16.mxu0 0
        %292 = vmatpush1.bf16.msra.mxu0 %v264
        %293 = vmatprep.subr.bf16.mxu0 0
        %294 = vmatpush1.bf16.msra.mxu0 %v263
        %295 = vmatprep.subr.bf16.mxu0 0
        %296 = vmatpush2.bf16.msra.mxu0 0
        %297 = vmatprep.subr.bf16.mxu0 0
        %298 = vmatpush2.bf16.msra.mxu0 0
        %299 = vmatprep.subr.bf16.mxu0 0
        %300 = vmatpush2.bf16.msra.mxu0 0
        %301 = vmatprep.subr.bf16.mxu0 0
        %302 = vmatpush2.bf16.msra.mxu0 0
        %303 = vmatprep.subr.bf16.mxu0 0
        %304 = vmatpush2.bf16.msra.mxu0 0
        %305 = vmatprep.subr.bf16.mxu0 0
        %306 = vmatpush2.bf16.msra.mxu0 0
        %307 = vmatprep.subr.bf16.mxu0 0
        %308 = vmatpush2.bf16.msra.mxu0 0
        %309 = vmatprep.subr.bf16.mxu0 0
        %310 = vmatpush2.bf16.msra.mxu0 0
        %311 = vmatprep.mubr.bf16.mxu0 0
        %312 = vmatmul.mubr.bf16.gmra.mxu0 %v203
        %v313 = vpop.f32.mrf.mxu0
        %v314 = vadd.f32 %v229, %v313
        %v315 = vpop.f32.mrf.mxu0
        %v316 = vpop.f32.mrf.mxu0
        %v317 = vpop.f32.mrf.mxu0
        %318 = vdwg.mxu0
        %319 = vst [vmem:[%s197] sm:$0xff] %v314
        %s320 = sand.u32 %s113, 1
        %s321 = scalar_lea.sflag [#allocation4], %s320
        %s322 = sand.u32 %s113, 1
        %s323 = smul.addr %s322, 8
        %s324 = scalar_lea.vmem [#allocation5], %s323
        // Predicated region
        $region37: #{_linear_bias_pallas.1} parent=31 // pred_check
          %p325 = pneg %p123
        $region38: #{_linear_bias_pallas.1} parent=31 // pred_check_branch
          %327 = sbr.rel (%p325) target = $region40
        $region39: #{_linear_bias_pallas.1} parent=31 // pred_region
          %s329 = ssub.s32 128, 128
          %330 = vsyncadd %s321, %s329
          %s331 = sadd.s32 %s23, %s22
          %s332 = smul.addr %s331, 128
          %s333 = scalar_lea.hbm %s3, %s332
          %s335 = sshll.u32 %s324, 4
          %s336 = int_to_ptr.vmem [resolvable:$true] %s335
          %338 = dma.vmem_to_hbm [thread:$0]  %s336, 128, %s333, %s321
        $region40: #{_linear_bias_pallas.1} parent=31 // pred_fallthru
          _
      $region32: #{_linear_bias_pallas.1} parent=5 // pred_fallthru
        _
      %p339 = scmp.le.s32.totalorder 2, %s13
      // Predicated region
      $region41: #{_linear_bias_pallas.1} parent=5 // pred_check
        %p340 = pneg %p339
      $region42: #{_linear_bias_pallas.1} parent=5 // pred_check_branch
        %342 = sbr.rel (%p340) target = $region44
      $region43: #{_linear_bias_pallas.1} parent=5 // pred_region
        %s343 = ssub.s32 %s13, 2
        // Predicated region
        $region45: #{_linear_bias_pallas.1} parent=43 // pred_check
          %p344 = pneg %p129
        $region46: #{_linear_bias_pallas.1} parent=43 // pred_check_branch
          %346 = sbr.rel (%p344) target = $region48
        $region47: #{_linear_bias_pallas.1} parent=43 // pred_region
          %s347 = sand.u32 %s114, 1
          %s348 = scalar_lea.sflag [#allocation4], %s347
          %s349 = sand.u32 %s114, 1
          %s350 = smul.addr %s349, 8
          %s351 = scalar_lea.vmem [#allocation5], %s350
          %352 = dma.done %s348, 128
        $region48: #{_linear_bias_pallas.1} parent=43 // pred_fallthru
          _
      $region44: #{_linear_bias_pallas.1} parent=5 // pred_fallthru
        _
    $region6: #{_linear_bias_pallas.1} parent=1 // loop_footer
      %s17 = sadd.s32 1, %s13
    $region7: #{_linear_bias_pallas.1} parent=1 // loop_footer_branch
      %12 = sbr.rel target = $region3
    $region8: #{_linear_bias_pallas.1} parent=1 // loop_exit
      _
    %353 = vsyncpa [#allocation3], 1
    %s354 = scalar_lea.sflag [#allocation3], 1
    %355 = vsyncpa %s354, 1
    %356 = vsyncpa [#allocation4], 1
    %s357 = scalar_lea.sflag [#allocation4], 1
    %358 = vsyncpa %s357, 1

</llo_original>
